<compile_context>
chip_gen: v7x
topology: tpu7x:2x2x1
jax: 0.10.0
libtpu: 0.0.40
codegen_flags: <defaults>
</compile_context>

<pallas_src>
import numpy as np
import jax
import jax.numpy as jnp
from jax import lax
from jax.experimental import pallas as pl
from jax.experimental.pallas import tpu as pltpu


TILE_N = 512          # batch rows per grid step (sweepable; 512-2048 is sane)


def _round_up(n, m):
    return ((n + m - 1) // m) * m


# ---------------------------------------------------------------------------
# Pallas kernel: entire CNN6Model.forward for one batch tile.
# ---------------------------------------------------------------------------
def cnn6_kernel(x_ref, w1_ref, b1_ref, a1_ref, wf_ref, bf_ref, a2_ref,
                w5_ref, b5_ref, out_ref):
    # conv1 as block-diagonal matmul over im2col rows: bf16 x bf16 -> f32 acc
    x = x_ref[...]                                                  # (T,192) bf16
    y = jnp.dot(x, w1_ref[...], preferred_element_type=jnp.float32)
    y = y + b1_ref[...]
    y = jnp.where(y >= 0.0, y, a1_ref[...] * y)                     # PReLU1 (f32)
    y = y.astype(jnp.bfloat16)                                      # (T,384)

    # avgpool + cnn2 + linear1 fused offline into one (384,128) matrix
    # TODO(synk): nn.Dropout(p=0.25) is identity in eval mode; stochastic
    # training-mode dropout is intentionally not implemented.
    z = jnp.dot(y, wf_ref[...], preferred_element_type=jnp.float32)
    z = z + bf_ref[...]
    z = jnp.where(z >= 0.0, z, a2_ref[...] * z)                     # PReLU2, (T,128)

    # linear2 (8 -> 1) on the VPU/XLU: padded lane-wise mul + reduce
    head = jnp.sum(z * w5_ref[...], axis=-1, keepdims=True) + b5_ref[...]
    out_ref[...] = head                                             # (T,1) f32


# ---------------------------------------------------------------------------
# Parameter construction (deterministic, PyTorch layouts).
# ---------------------------------------------------------------------------
def make_params(key):
    ks = jax.random.split(key, 10)
    s = 0.1
    return {
        "w_cnn1": s * jax.random.normal(ks[0], (32, 1, 4, 4), jnp.float32),
        "b_cnn1": s * jax.random.normal(ks[1], (32,), jnp.float32),
        "w_cnn2": s * jax.random.normal(ks[2], (32, 32, 2, 2), jnp.float32),
        "b_cnn2": s * jax.random.normal(ks[3], (32,), jnp.float32),
        "w_lin1": s * jax.random.normal(ks[4], (8, 32), jnp.float32),
        "b_lin1": s * jax.random.normal(ks[5], (8,), jnp.float32),
        "w_lin2": s * jax.random.normal(ks[6], (1, 8), jnp.float32),
        "b_lin2": s * jax.random.normal(ks[7], (1,), jnp.float32),
        "a1": jnp.float32(0.25),      # nn.PReLU() default init
        "a2": jnp.float32(0.25),
    }


def prepack_params(p):
    """One-time weight repackaging (hoisted out of the steady-state forward)."""
    # conv1 -> block-diagonal (192, 384): each of the 12 patch blocks gets the
    # same (16 taps, 32 filters) matrix.
    w1_loc = p["w_cnn1"].reshape(32, 16).T                          # (16, 32)
    w1_big = jnp.kron(jnp.eye(12, dtype=jnp.float32), w1_loc)       # (192, 384)
    b1_big = jnp.tile(p["b_cnn1"], 12).reshape(1, 384)

    # avgpool (k=(2,2), stride=(1,2)) on the 3x4 map as a (384, 128) linear map.
    pool_sp = np.zeros((12, 4), np.float32)        # rows oy*4+ox, cols py*2+px
    for py in range(2):
        for px in range(2):
            for dy in range(2):
                for dx in range(2):
                    pool_sp[(py + dy) * 4 + (2 * px + dx), py * 2 + px] = 0.25
    P = jnp.asarray(np.kron(pool_sp, np.eye(32, dtype=np.float32)))  # (384, 128)

    # cnn2 (full 2x2 window conv) as a dense (128, 32) matrix over the pooled
    # vector laid out as (ky*2+kx)*32 + channel.
    w2_dense = p["w_cnn2"].transpose(2, 3, 1, 0).reshape(128, 32)
    # linear1
    w3 = p["w_lin1"].T                                               # (32, 8)

    # Fuse avgpool ∘ cnn2 ∘ linear1 (all linear, no activation in between).
    wf = P @ w2_dense @ w3                                           # (384, 8)
    bf = p["b_cnn2"] @ w3 + p["b_lin1"]                              # (8,)

    # Zero-pad the 8-wide tail to a full 128-lane width (clean vreg layouts;
    # padded lanes stay exactly zero through bias/PReLU and are masked out of
    # the head by the zero-padded linear2 weights).
    wf_pad = jnp.zeros((384, 128), jnp.float32).at[:, :8].set(wf)
    bf_pad = jnp.zeros((1, 128), jnp.float32).at[0, :8].set(bf)
    w5_pad = jnp.zeros((1, 128), jnp.float32).at[0, :8].set(p["w_lin2"][0])

    return {
        "W1": w1_big.astype(jnp.bfloat16),
        "b1": b1_big.astype(jnp.float32),
        "a1": jnp.full((1, 384), p["a1"], jnp.float32),
        "Wf": wf_pad.astype(jnp.bfloat16),
        "bf": bf_pad,
        "a2": jnp.full((1, 128), p["a2"], jnp.float32),
        "w5": w5_pad,
        "b5": jnp.reshape(p["b_lin2"], (1, 1)).astype(jnp.float32),
    }


# ---------------------------------------------------------------------------
# Forward: im2col (fused in the same jit) + batch-gridded pallas_call.
# ---------------------------------------------------------------------------
def _im2col_conv1(x):
    """(N,1,6,7) -> (N,192); column index = (oy*4+ox)*16 + ky*4 + kx."""
    n = x.shape[0]
    cols = []
    for oy in range(3):
        for ox in range(4):
            cols.append(x[:, 0, oy:oy + 4, ox:ox + 4].reshape(n, 16))
    return jnp.concatenate(cols, axis=1)


@jax.jit
def cnn6_forward(x, pk):
    n = x.shape[0]
    assert x.shape[1:] == (1, 6, 7), "view(-1, 32) requires cnn2 output of 1x1"

    xflat = _im2col_conv1(x.astype(jnp.float32)).astype(jnp.bfloat16)  # (N,192)

    tile_n = min(TILE_N, _round_up(n, 16))
    n_pad = _round_up(n, tile_n)
    if n_pad != n:
        xflat = jnp.pad(xflat, ((0, n_pad - n), (0, 0)))

    grid = (n_pad // tile_n,)
    const = lambda i: (0, 0)          # weights/biases stay VMEM-resident

    out = pl.pallas_call(
        cnn6_kernel,
        out_shape=jax.ShapeDtypeStruct((n_pad, 1), jnp.float32),
        grid=grid,
        in_specs=[
            pl.BlockSpec((tile_n, 192), lambda i: (i, 0)),   # activation stream
            pl.BlockSpec((192, 384), const),                 # W1 (block-diag conv1)
            pl.BlockSpec((1, 384), const),                   # b1
            pl.BlockSpec((1, 384), const),                   # PReLU1 alpha row
            pl.BlockSpec((384, 128), const),                 # fused pool∘cnn2∘lin1
            pl.BlockSpec((1, 128), const),                   # fused bias
            pl.BlockSpec((1, 128), const),                   # PReLU2 alpha row
            pl.BlockSpec((1, 128), const),                   # linear2 weight row
            pl.BlockSpec((1, 1), const),                     # linear2 bias
        ],
        out_specs=pl.BlockSpec((tile_n, 1), lambda i: (i, 0)),
        compiler_params=pltpu.CompilerParams(
            dimension_semantics=("parallel",)),              # megacore on v7x
    )(xflat, pk["W1"], pk["b1"], pk["a1"], pk["Wf"], pk["bf"],
      pk["a2"], pk["w5"], pk["b5"])
    return out[:n]


# ---------------------------------------------------------------------------
# Pure-JAX reference (matches PyTorch semantics) for correctness check.
# ---------------------------------------------------------------------------
def reference_forward(x, p):
    def prelu(v, a):
        return jnp.where(v >= 0, v, a * v)

    out = lax.conv_general_dilated(
        x, p["w_cnn1"], window_strides=(1, 1), padding="VALID",
        dimension_numbers=("NCHW", "OIHW", "NCHW"))
    out = out + p["b_cnn1"].reshape(1, -1, 1, 1)
    out = prelu(out, p["a1"])

    out = lax.reduce_window(out, 0.0, lax.add,
                            window_dimensions=(1, 1, 2, 2),
                            window_strides=(1, 1, 1, 2),
                            padding="VALID") / 4.0                  # AvgPool2d

    out = lax.conv_general_dilated(
        out, p["w_cnn2"], window_strides=(1, 1), padding="VALID",
        dimension_numbers=("NCHW", "OIHW", "NCHW"))
    out = out + p["b_cnn2"].reshape(1, -1, 1, 1)

    out = out.reshape(-1, 32)                    # flatten + view(-1, 32)
    # dropout(p=0.25) is identity in eval mode
    out = out @ p["w_lin1"].T + p["b_lin1"]
    out = prelu(out, p["a2"])
    out = out @ p["w_lin2"].T + p["b_lin2"]
    return out


if __name__ == "__main__":
    key = jax.random.PRNGKey(0)
    kx1, kx2, kp = jax.random.split(key, 3)

    params = make_params(kp)
    packed = prepack_params(params)              # one-time repack, not per-call

    # Small batch (shape check + correctness).
    x_small = jax.random.normal(kx1, (2, 1, 6, 7), jnp.float32)
    out_small = jax.block_until_ready(cnn6_forward(x_small, packed))
    ref_small = jax.block_until_ready(reference_forward(x_small, params))
    assert out_small.shape == (2, 1)
    assert jnp.allclose(out_small, ref_small, atol=1e-2, rtol=1e-2), (out_small, ref_small)

    # Larger batch: exercises the batch grid (2 tiles of 512) + parallel axis.
    x_big = jax.random.normal(kx2, (1024, 1, 6, 7), jnp.float32)
    out_big = jax.block_until_ready(cnn6_forward(x_big, packed))
    ref_big = jax.block_until_ready(reference_forward(x_big, params))
    assert out_big.shape == (1024, 1)
    assert jnp.allclose(out_big, ref_big, atol=1e-2, rtol=1e-2)

    print("KERNEL_OK")
</pallas_src>

<mosaic_0001>
module attributes {stable_mosaic.version = 11 : i64} {
  func.func @cnn6_kernel(%arg0: i32, %arg1: memref<16x192xbf16, #tpu.memory_space<vmem>>, %arg2: memref<192x384xbf16, #tpu.memory_space<vmem>>, %arg3: memref<1x384xf32, #tpu.memory_space<vmem>>, %arg4: memref<1x384xf32, #tpu.memory_space<vmem>>, %arg5: memref<384x128xbf16, #tpu.memory_space<vmem>>, %arg6: memref<1x128xf32, #tpu.memory_space<vmem>>, %arg7: memref<1x128xf32, #tpu.memory_space<vmem>>, %arg8: memref<1x128xf32, #tpu.memory_space<vmem>>, %arg9: memref<1x1xf32, #tpu.memory_space<vmem>>, %arg10: memref<16x1xf32, #tpu.memory_space<vmem>>) attributes {dimension_semantics = [#tpu.dimension_semantics<parallel>], iteration_bounds = array<i64: 1>, scalar_prefetch = 0 : i64, scratch_operands = 0 : i64, tpu.core_type = #tpu.core_type<tc>, window_params = [{transform_indices = @transform_0, window_bounds = array<i64: 16, 192>}, {pipeline_mode = #tpu.pipeline_mode<synchronous>, transform_indices = @transform_1, window_bounds = array<i64: 192, 384>}, {pipeline_mode = #tpu.pipeline_mode<synchronous>, transform_indices = @transform_2, window_bounds = array<i64: 1, 384>}, {pipeline_mode = #tpu.pipeline_mode<synchronous>, transform_indices = @transform_3, window_bounds = array<i64: 1, 384>}, {pipeline_mode = #tpu.pipeline_mode<synchronous>, transform_indices = @transform_4, window_bounds = array<i64: 384, 128>}, {pipeline_mode = #tpu.pipeline_mode<synchronous>, transform_indices = @transform_5, window_bounds = array<i64: 1, 128>}, {pipeline_mode = #tpu.pipeline_mode<synchronous>, transform_indices = @transform_6, window_bounds = array<i64: 1, 128>}, {pipeline_mode = #tpu.pipeline_mode<synchronous>, transform_indices = @transform_7, window_bounds = array<i64: 1, 128>}, {pipeline_mode = #tpu.pipeline_mode<synchronous>, transform_indices = @transform_8, window_bounds = array<i64: 1, 1>}, {transform_indices = @transform_9, window_bounds = array<i64: 16, 1>}]} {
    %c0 = arith.constant 0 : index
    %c0_0 = arith.constant 0 : index
    %0 = vector.load %arg1[%c0, %c0_0] : memref<16x192xbf16, #tpu.memory_space<vmem>>, vector<16x192xbf16>
    %c0_1 = arith.constant 0 : index
    %c0_2 = arith.constant 0 : index
    %1 = vector.load %arg2[%c0_1, %c0_2] : memref<192x384xbf16, #tpu.memory_space<vmem>>, vector<192x384xbf16>
    %cst = arith.constant dense<0.000000e+00> : vector<16x384xf32>
    %2 = tpu.matmul %0, %1, %cst {dimension_numbers = #tpu.dot_dimension_numbers<[1], [0], [0], [1], [0, 0, 1, 1], [], []>} : vector<16x192xbf16>, vector<192x384xbf16>, vector<16x384xf32> -> vector<16x384xf32>
    %c0_3 = arith.constant 0 : index
    %c0_4 = arith.constant 0 : index
    %3 = vector.load %arg3[%c0_3, %c0_4] : memref<1x384xf32, #tpu.memory_space<vmem>>, vector<1x384xf32>
    %4 = vector.broadcast %3 : vector<1x384xf32> to vector<16x384xf32>
    %5 = arith.addf %2, %4 : vector<16x384xf32>
    %cst_5 = arith.constant 0.000000e+00 : f32
    %6 = vector.broadcast %cst_5 : f32 to vector<16x384xf32>
    %7 = arith.cmpf oge, %5, %6 : vector<16x384xf32>
    %c0_6 = arith.constant 0 : index
    %c0_7 = arith.constant 0 : index
    %8 = vector.load %arg4[%c0_6, %c0_7] : memref<1x384xf32, #tpu.memory_space<vmem>>, vector<1x384xf32>
    %9 = vector.broadcast %8 : vector<1x384xf32> to vector<16x384xf32>
    %10 = arith.mulf %9, %5 : vector<16x384xf32>
    %11 = arith.select %7, %5, %10 : vector<16x384xi1>, vector<16x384xf32>
    %12 = arith.truncf %11 : vector<16x384xf32> to vector<16x384xbf16>
    %c0_8 = arith.constant 0 : index
    %c0_9 = arith.constant 0 : index
    %13 = vector.load %arg5[%c0_8, %c0_9] : memref<384x128xbf16, #tpu.memory_space<vmem>>, vector<384x128xbf16>
    %cst_10 = arith.constant dense<0.000000e+00> : vector<16x128xf32>
    %14 = tpu.matmul %12, %13, %cst_10 {dimension_numbers = #tpu.dot_dimension_numbers<[1], [0], [0], [1], [0, 0, 1, 1], [], []>} : vector<16x384xbf16>, vector<384x128xbf16>, vector<16x128xf32> -> vector<16x128xf32>
    %c0_11 = arith.constant 0 : index
    %c0_12 = arith.constant 0 : index
    %15 = vector.load %arg6[%c0_11, %c0_12] : memref<1x128xf32, #tpu.memory_space<vmem>>, vector<1x128xf32>
    %16 = vector.broadcast %15 : vector<1x128xf32> to vector<16x128xf32>
    %17 = arith.addf %14, %16 : vector<16x128xf32>
    %cst_13 = arith.constant 0.000000e+00 : f32
    %18 = vector.broadcast %cst_13 : f32 to vector<16x128xf32>
    %19 = arith.cmpf oge, %17, %18 : vector<16x128xf32>
    %c0_14 = arith.constant 0 : index
    %c0_15 = arith.constant 0 : index
    %20 = vector.load %arg7[%c0_14, %c0_15] : memref<1x128xf32, #tpu.memory_space<vmem>>, vector<1x128xf32>
    %21 = vector.broadcast %20 : vector<1x128xf32> to vector<16x128xf32>
    %22 = arith.mulf %21, %17 : vector<16x128xf32>
    %23 = arith.select %19, %17, %22 : vector<16x128xi1>, vector<16x128xf32>
    %c0_16 = arith.constant 0 : index
    %c0_17 = arith.constant 0 : index
    %24 = vector.load %arg8[%c0_16, %c0_17] : memref<1x128xf32, #tpu.memory_space<vmem>>, vector<1x128xf32>
    %25 = vector.broadcast %24 : vector<1x128xf32> to vector<16x128xf32>
    %26 = arith.mulf %23, %25 : vector<16x128xf32>
    %cst_18 = arith.constant dense<0.000000e+00> : vector<16xf32>
    %27 = vector.multi_reduction <add>, %26, %cst_18 [1] : vector<16x128xf32> to vector<16xf32>
    %28 = vector.shape_cast %27 : vector<16xf32> to vector<16x1xf32>
    %c0_19 = arith.constant 0 : index
    %c0_20 = arith.constant 0 : index
    %29 = vector.load %arg9[%c0_19, %c0_20] : memref<1x1xf32, #tpu.memory_space<vmem>>, vector<1x1xf32>
    %30 = vector.broadcast %29 : vector<1x1xf32> to vector<16x1xf32>
    %31 = arith.addf %28, %30 : vector<16x1xf32>
    %c0_21 = arith.constant 0 : index
    %c0_22 = arith.constant 0 : index
    %32 = vector.load %arg10[%c0_21, %c0_22] : memref<16x1xf32, #tpu.memory_space<vmem>>, vector<16x1xf32>
    tpu.vector_store %arg10[%c0_21, %c0_22], %31 {strides = array<i32>} : memref<16x1xf32, #tpu.memory_space<vmem>>, vector<16x1xf32>,
    return
  }
  func.func @transform_0(%arg0: i32) -> (i32, i32) {
    %c0_i32 = arith.constant 0 : i32
    %c0_i32_0 = arith.constant 0 : i32
    return %arg0, %c0_i32 : i32, i32
  }
  func.func @transform_1(%arg0: i32) -> (i32, i32) {
    %c0_i32 = arith.constant 0 : i32
    %c0_i32_0 = arith.constant 0 : i32
    %c0_i32_1 = arith.constant 0 : i32
    return %c0_i32, %c0_i32_0 : i32, i32
  }
  func.func @transform_2(%arg0: i32) -> (i32, i32) {
    %c0_i32 = arith.constant 0 : i32
    %c0_i32_0 = arith.constant 0 : i32
    %c0_i32_1 = arith.constant 0 : i32
    return %c0_i32, %c0_i32_0 : i32, i32
  }
  func.func @transform_3(%arg0: i32) -> (i32, i32) {
    %c0_i32 = arith.constant 0 : i32
    %c0_i32_0 = arith.constant 0 : i32
    %c0_i32_1 = arith.constant 0 : i32
    return %c0_i32, %c0_i32_0 : i32, i32
  }
  func.func @transform_4(%arg0: i32) -> (i32, i32) {
    %c0_i32 = arith.constant 0 : i32
    %c0_i32_0 = arith.constant 0 : i32
    %c0_i32_1 = arith.constant 0 : i32
    return %c0_i32, %c0_i32_0 : i32, i32
  }
  func.func @transform_5(%arg0: i32) -> (i32, i32) {
    %c0_i32 = arith.constant 0 : i32
    %c0_i32_0 = arith.constant 0 : i32
    %c0_i32_1 = arith.constant 0 : i32
    return %c0_i32, %c0_i32_0 : i32, i32
  }
  func.func @transform_6(%arg0: i32) -> (i32, i32) {
    %c0_i32 = arith.constant 0 : i32
    %c0_i32_0 = arith.constant 0 : i32
    %c0_i32_1 = arith.constant 0 : i32
    return %c0_i32, %c0_i32_0 : i32, i32
  }
  func.func @transform_7(%arg0: i32) -> (i32, i32) {
    %c0_i32 = arith.constant 0 : i32
    %c0_i32_0 = arith.constant 0 : i32
    %c0_i32_1 = arith.constant 0 : i32
    return %c0_i32, %c0_i32_0 : i32, i32
  }
  func.func @transform_8(%arg0: i32) -> (i32, i32) {
    %c0_i32 = arith.constant 0 : i32
    %c0_i32_0 = arith.constant 0 : i32
    %c0_i32_1 = arith.constant 0 : i32
    return %c0_i32, %c0_i32_0 : i32, i32
  }
  func.func @transform_9(%arg0: i32) -> (i32, i32) {
    %c0_i32 = arith.constant 0 : i32
    %c0_i32_0 = arith.constant 0 : i32
    return %arg0, %c0_i32 : i32, i32
  }
}

</mosaic_0001>

<llo_original>
// kernel: squeeze.0
$region0: #{squeeze.0}
  %s0 = inlined_call_operand.vmem [shape: bf16[2,4,4], index: 0, kind: input, shape index: {}]
  %s1 = inlined_call_operand.vmem [shape: bf16[2,16], index: 1, kind: output, shape index: {}]
  $region1: #{squeeze.0} parent=0
    #allocation0 [shape = 'u8[4096]{0}', space=vmem, size = 0x1000, scoped, tag = 'scoped mem for output reshape']
    #allocation1 [shape = 'u8[8192]{0}', space=vmem, size = 0x2000, scoped, tag = 'scoped mem for input reshape']
    %s3 = smul.u32 2, 2
    %s4 = sshllo.u32 0, %s3
    %s5 = scalar_lea.vmem %s0, 2
    %s6 = sshrl.u32 %s4, 1
    %s7 = sor.u32 %s4, %s6
    %s8 = sand.u32 %s7, 85
    %s9 = sshrl.u32 %s8, 1
    %s10 = sor.u32 %s8, %s9
    %s11 = sand.u32 51, %s10
    %s12 = sshrl.u32 %s11, 2
    %s13 = sor.u32 %s11, %s12
    %s14 = sand.u32 15, %s13
    %v15 = vld [vmem:[%s5] sm:%s14]
    %v16 = vunpack.c.l.bf16 %v15
    %v17 = vunpack.c.h.bf16 %v15
    %s18 = scalar_lea.vmem [#allocation1], 8
    %19 = vst [vmem:[%s18] sm:%s4] %v16
    %s20 = sshrl.u32 %s4, 1
    %s21 = sor.u32 %s4, %s20
    %s22 = sand.u32 %s21, 85
    %s23 = sshrl.u32 %s22, 1
    %s24 = sor.u32 %s22, %s23
    %s25 = sand.u32 51, %s24
    %s26 = sshrl.u32 %s25, 2
    %s27 = sor.u32 %s25, %s26
    %s28 = sand.u32 15, %s27
    %v29 = vld [vmem:[%s0] sm:%s28]
    %v30 = vunpack.c.l.bf16 %v29
    %v31 = vunpack.c.h.bf16 %v29
    %32 = vst [vmem:[#allocation1] sm:%s4] %v30
    %s33 = smov 3
    %v34 = vld [vmem:[#allocation1] ss:$8 sm:%s33]
    %vm35 = vcmask 31744
    %36 = vst.msk [vmem:[#allocation0] sm:$0x3] %vm35, %v34
    %s37 = scalar_lea.vmem [#allocation1], 3
    %s38 = smov 3
    %v39 = vld [vmem:[%s37] ss:$8 sm:%s38]
    %40 = vrot.lane.b32.xlu0 %v39, 12
    %v41 = vpop.permute.xlu0 %40
    %vm42 = vcmask 130144
    %43 = vst.msk [vmem:[#allocation0] sm:$0x3] %vm42, %v41
    %s44 = scalar_lea.vmem [#allocation1], 2
    %s45 = smov 3
    %v46 = vld [vmem:[%s44] ss:$8 sm:%s45]
    %47 = vrot.lane.b32.xlu0 %v46, 8
    %v48 = vpop.permute.xlu0 %47
    %vm49 = vcmask 97344
    %50 = vst.msk [vmem:[#allocation0] sm:$0x3] %vm49, %v48
    %s51 = scalar_lea.vmem [#allocation1], 1
    %s52 = smov 3
    %v53 = vld [vmem:[%s51] ss:$8 sm:%s52]
    %54 = vrot.lane.b32.xlu0 %v53, 4
    %v55 = vpop.permute.xlu0 %54
    %vm56 = vcmask 64544
    %57 = vst.msk [vmem:[#allocation0] sm:$0x3] %vm56, %v55
    %s59 = smul.u32 1, 2
    %s60 = sshllo.u32 0, %s59
    %s61 = sshrl.u32 %s59, 1
    %v62 = vld [vmem:[#allocation0] sm:%s60]
    %v63 = vpack.c.bf16 0.0, %v62
    %s64 = sshllo.u32 0, %s61
    %65 = vst [vmem:[%s1] sm:%s64] %v63

// kernel: cnn6_forward.1
$region0: #{cnn6_forward.1}
  #allocation0 [shape = 'u32[]', space=smem, size = 0x4, offset = 0x4, fixed_abs, tag = 'smem constant byte address 0x4 - core index']
  #allocation1 [shape = 'u32[144,128]{1,0:T(1,128)}', space=vmem, size = 0x12000, scoped, tag = 'internal scratch']
  #allocation2 [shape = 'f32[1,1]{1,0:T(1,128)S(1)}', space=vmem, size = 0x200, scoped, tag = 'scoped memory for cnn6_forward.1']
  %s0 = inlined_call_operand.vmem [shape: bf16[16,192], index: 0, kind: input, shape index: {}]
  %s1 = inlined_call_operand.vmem [shape: bf16[192,384], index: 1, kind: input, shape index: {}]
  %s2 = inlined_call_operand.vmem [shape: f32[1,384], index: 2, kind: input, shape index: {}]
  %s3 = inlined_call_operand.vmem [shape: f32[1,384], index: 3, kind: input, shape index: {}]
  %s4 = inlined_call_operand.hbm [shape: bf16[384,128], index: 4, kind: input, shape index: {}]
  %s5 = inlined_call_operand.vmem [shape: f32[1,128], index: 5, kind: input, shape index: {}]
  %s6 = inlined_call_operand.vmem [shape: f32[1,128], index: 6, kind: input, shape index: {}]
  %s7 = inlined_call_operand.vmem [shape: f32[1,128], index: 7, kind: input, shape index: {}]
  %s8 = inlined_call_operand.<no memory space> [shape: f32[1,1], index: 8, kind: input, shape index: {}]
  %s9 = inlined_call_operand.vmem [shape: f32[16,1], index: 9, kind: output, shape index: {}]
  %s10 = sld [smem:[#allocation0]]
  $region50: #{cnn6_forward.1} parent=0
    _
  %s12 = ssub.s32 1, %s10
  %s13 = scalar_select 0, %s12, %s10
  %v14 = vstv %s8
  %15 = vst [vmem:[#allocation2] sm:$0x1] %v14
  $region1: #{cnn6_forward.1} parent=0
    #allocation3 [shape = 'u8[98304]{0}', space=vmem, size = 0x18000, scoped, tag = 'input window, operand 4, single buffered']
    #allocation4 [shape = 's32[1]{0}', space=sflag, size = 0x4, scoped, tag = 'scoped memory for cnn6_forward.1']
    %16 = vsyncpa [#allocation4], 0
    // Predicated region
    $region2: #{cnn6_forward.1} parent=1 // pred_check
      _
    $region3: #{cnn6_forward.1} parent=1 // pred_check_branch
      %18 = sbr.rel (0) target = $region5
    $region4: #{cnn6_forward.1} parent=1 // pred_region
      _
    $region5: #{cnn6_forward.1} parent=1 // pred_fallthru
      _
    // Predicated region
    $region6: #{cnn6_forward.1} parent=1 // pred_check
      _
    $region7: #{cnn6_forward.1} parent=1 // pred_check_branch
      %20 = sbr.rel (0) target = $region9
    $region8: #{cnn6_forward.1} parent=1 // pred_region
      _
    $region9: #{cnn6_forward.1} parent=1 // pred_fallthru
      _
    // Predicated region
    $region10: #{cnn6_forward.1} parent=1 // pred_check
      _
    $region11: #{cnn6_forward.1} parent=1 // pred_check_branch
      %22 = sbr.rel (0) target = $region13
    $region12: #{cnn6_forward.1} parent=1 // pred_region
      _
    $region13: #{cnn6_forward.1} parent=1 // pred_fallthru
      _
    // Predicated region
    $region14: #{cnn6_forward.1} parent=1 // pred_check
      _
    $region15: #{cnn6_forward.1} parent=1 // pred_check_branch
      %24 = sbr.rel (0) target = $region17
    $region16: #{cnn6_forward.1} parent=1 // pred_region
      _
    $region17: #{cnn6_forward.1} parent=1 // pred_fallthru
      _
    // Predicated region
    $region18: #{cnn6_forward.1} parent=1 // pred_check
      _
    $region19: #{cnn6_forward.1} parent=1 // pred_check_branch
      %26 = sbr.rel (0) target = $region21
    $region20: #{cnn6_forward.1} parent=1 // pred_region
      %s28 = ssub.s32 3072, 3072
      %29 = vsyncadd [#allocation4], %s28
      %s30 = sshll.u32 [#allocation3], 4
      %s31 = int_to_ptr.vmem [resolvable:$true] %s30
      %36 = dma.hbm_to_vmem [thread:$0]  %s4, 3072, %s31, [#allocation4], 64, 64, 4
    $region21: #{cnn6_forward.1} parent=1 // pred_fallthru
      _
    // Predicated region
    $region22: #{cnn6_forward.1} parent=1 // pred_check
      _
    $region23: #{cnn6_forward.1} parent=1 // pred_check_branch
      %38 = sbr.rel (0) target = $region25
    $region24: #{cnn6_forward.1} parent=1 // pred_region
      _
    $region25: #{cnn6_forward.1} parent=1 // pred_fallthru
      _
    // Predicated region
    $region26: #{cnn6_forward.1} parent=1 // pred_check
      _
    $region27: #{cnn6_forward.1} parent=1 // pred_check_branch
      %40 = sbr.rel (0) target = $region29
    $region28: #{cnn6_forward.1} parent=1 // pred_region
      _
    $region29: #{cnn6_forward.1} parent=1 // pred_fallthru
      _
    // Predicated region
    $region30: #{cnn6_forward.1} parent=1 // pred_check
      _
    $region31: #{cnn6_forward.1} parent=1 // pred_check_branch
      %42 = sbr.rel (0) target = $region33
    $region32: #{cnn6_forward.1} parent=1 // pred_region
      _
    $region33: #{cnn6_forward.1} parent=1 // pred_fallthru
      _
    // Predicated region
    $region34: #{cnn6_forward.1} parent=1 // pred_check
      _
    $region35: #{cnn6_forward.1} parent=1 // pred_check_branch
      %44 = sbr.rel (0) target = $region37
    $region36: #{cnn6_forward.1} parent=1 // pred_region
      _
    $region37: #{cnn6_forward.1} parent=1 // pred_fallthru
      _
    // Predicated region
    $region38: #{cnn6_forward.1} parent=1 // pred_check
      _
    $region39: #{cnn6_forward.1} parent=1 // pred_check_branch
      %46 = sbr.rel (0) target = $region41
    $region40: #{cnn6_forward.1} parent=1 // pred_region
      %47 = dma.done [#allocation4], 3072
    $region41: #{cnn6_forward.1} parent=1 // pred_fallthru
      _
    %v49 = vld [vmem:[%s0] sm:$0xff]
    %v50 = vld [vmem:[%s0 + $0x8] sm:$0xff]
    %v51 = vld [vmem:[%s1] sm:$0xff]
    %v52 = vld [vmem:[%s1 + $0x8] sm:$0xf]
    %v53 = vld [vmem:[%s1 + $0xc] sm:$0xff]
    %v54 = vld [vmem:[%s1 + $0x14] sm:$0xf]
    %v55 = vld [vmem:[%s1 + $0x18] sm:$0xff]
    %v56 = vld [vmem:[%s1 + $0x20] sm:$0xf]
    %v57 = vld [vmem:[%s1 + $0x24] sm:$0xff]
    %v58 = vld [vmem:[%s1 + $0x2c] sm:$0xf]
    %v59 = vld [vmem:[%s1 + $0x30] sm:$0xff]
    %v60 = vld [vmem:[%s1 + $0x38] sm:$0xf]
    %v61 = vld [vmem:[%s1 + $0x3c] sm:$0xff]
    %v62 = vld [vmem:[%s1 + $0x44] sm:$0xf]
    %v63 = vld [vmem:[%s1 + $0x48] sm:$0xff]
    %v64 = vld [vmem:[%s1 + $0x50] sm:$0xf]
    %v65 = vld [vmem:[%s1 + $0x54] sm:$0xff]
    %v66 = vld [vmem:[%s1 + $0x5c] sm:$0xf]
    %v67 = vld [vmem:[%s1 + $0x60] sm:$0xff]
    %v68 = vld [vmem:[%s1 + $0x68] sm:$0xf]
    %v69 = vld [vmem:[%s1 + $0x6c] sm:$0xff]
    %v70 = vld [vmem:[%s1 + $0x74] sm:$0xf]
    %v71 = vld [vmem:[%s1 + $0x78] sm:$0xff]
    %v72 = vld [vmem:[%s1 + $0x80] sm:$0xf]
    %v73 = vld [vmem:[%s1 + $0x84] sm:$0xff]
    %v74 = vld [vmem:[%s1 + $0x8c] sm:$0xf]
    %v75 = vld [vmem:[%s1 + $0x90] sm:$0xff]
    %v76 = vld [vmem:[%s1 + $0x98] sm:$0xf]
    %v77 = vld [vmem:[%s1 + $0x9c] sm:$0xff]
    %v78 = vld [vmem:[%s1 + $0xa4] sm:$0xf]
    %v79 = vld [vmem:[%s1 + $0xa8] sm:$0xff]
    %v80 = vld [vmem:[%s1 + $0xb0] sm:$0xf]
    %v81 = vld [vmem:[%s1 + $0xb4] sm:$0xff]
    %v82 = vld [vmem:[%s1 + $0xbc] sm:$0xf]
    %v83 = vld [vmem:[%s1 + $0xc0] sm:$0xff]
    %v84 = vld [vmem:[%s1 + $0xc8] sm:$0xf]
    %v85 = vld [vmem:[%s1 + $0xcc] sm:$0xff]
    %v86 = vld [vmem:[%s1 + $0xd4] sm:$0xf]
    %v87 = vld [vmem:[%s1 + $0xd8] sm:$0xff]
    %v88 = vld [vmem:[%s1 + $0xe0] sm:$0xf]
    %v89 = vld [vmem:[%s1 + $0xe4] sm:$0xff]
    %v90 = vld [vmem:[%s1 + $0xec] sm:$0xf]
    %v91 = vld [vmem:[%s1 + $0xf0] sm:$0xff]
    %v92 = vld [vmem:[%s1 + $0xf8] sm:$0xf]
    %v93 = vld [vmem:[%s1 + $0xfc] sm:$0xff]
    %v94 = vld [vmem:[%s1 + $0x104] sm:$0xf]
    %v95 = vld [vmem:[%s1 + $0x108] sm:$0xff]
    %v96 = vld [vmem:[%s1 + $0x110] sm:$0xf]
    %v97 = vld [vmem:[%s1 + $0x114] sm:$0xff]
    %v98 = vld [vmem:[%s1 + $0x11c] sm:$0xf]
    %v99 = vld [vmem:[%s2] sm:$0x7]
    %v101 = vlaneseq
    %v102 = vshrl.u32 %v101, 7
    %v103 = vsub.s32 0, %v102
    %v104 = vrot.slane %v99, %v103
    %v105 = vlaneseq
    %v106 = vshrl.u32 %v105, 7
    %v107 = vsub.s32 1, %v106
    %v108 = vrot.slane %v99, %v107
    %v109 = vlaneseq
    %v110 = vshrl.u32 %v109, 7
    %v111 = vsub.s32 2, %v110
    %v112 = vrot.slane %v99, %v111
    %v118 = vunpack.c.l.b16 %v49
    %v119 = vunpack.c.h.b16 %v49
    %v120 = vunpack.c.l.b16 %v50
    %v121 = vunpack.c.h.b16 %v50
    %v122 = vpack.c.b16 %v120, %v118
    %v123 = vpack.c.b16 %v121, %v119
    %v173 = vunpack.c.l.b16 %v51
    %v174 = vunpack.c.h.b16 %v51
    %v175 = vunpack.c.l.b16 %v52
    %v176 = vunpack.c.l.b16 %v53
    %v177 = vunpack.c.h.b16 %v53
    %v178 = vunpack.c.l.b16 %v54
    %v179 = vunpack.c.l.b16 %v55
    %v180 = vunpack.c.h.b16 %v55
    %v181 = vunpack.c.l.b16 %v56
    %v182 = vunpack.c.l.b16 %v57
    %v183 = vunpack.c.h.b16 %v57
    %v184 = vunpack.c.l.b16 %v58
    %v185 = vunpack.c.l.b16 %v59
    %v186 = vunpack.c.h.b16 %v59
    %v187 = vunpack.c.l.b16 %v60
    %v188 = vunpack.c.l.b16 %v61
    %v189 = vunpack.c.h.b16 %v61
    %v190 = vunpack.c.l.b16 %v62
    %v191 = vunpack.c.l.b16 %v63
    %v192 = vunpack.c.h.b16 %v63
    %v193 = vunpack.c.l.b16 %v64
    %v194 = vunpack.c.l.b16 %v65
    %v195 = vunpack.c.h.b16 %v65
    %v196 = vunpack.c.l.b16 %v66
    %v197 = vunpack.c.l.b16 %v67
    %v198 = vunpack.c.h.b16 %v67
    %v199 = vunpack.c.l.b16 %v68
    %v200 = vunpack.c.l.b16 %v69
    %v201 = vunpack.c.h.b16 %v69
    %v202 = vunpack.c.l.b16 %v70
    %v203 = vunpack.c.l.b16 %v71
    %v204 = vunpack.c.h.b16 %v71
    %v205 = vunpack.c.l.b16 %v72
    %v206 = vunpack.c.l.b16 %v73
    %v207 = vunpack.c.h.b16 %v73
    %v208 = vunpack.c.l.b16 %v74
    %v209 = vunpack.c.l.b16 %v75
    %v210 = vunpack.c.h.b16 %v75
    %v211 = vunpack.c.l.b16 %v76
    %v212 = vunpack.c.l.b16 %v77
    %v213 = vunpack.c.h.b16 %v77
    %v214 = vunpack.c.l.b16 %v78
    %v215 = vunpack.c.l.b16 %v79
    %v216 = vunpack.c.h.b16 %v79
    %v217 = vunpack.c.l.b16 %v80
    %v218 = vunpack.c.l.b16 %v81
    %v219 = vunpack.c.h.b16 %v81
    %v220 = vunpack.c.l.b16 %v82
    %v221 = vunpack.c.l.b16 %v83
    %v222 = vunpack.c.h.b16 %v83
    %v223 = vunpack.c.l.b16 %v84
    %v224 = vunpack.c.l.b16 %v85
    %v225 = vunpack.c.h.b16 %v85
    %v226 = vunpack.c.l.b16 %v86
    %v227 = vunpack.c.l.b16 %v87
    %v228 = vunpack.c.h.b16 %v87
    %v229 = vunpack.c.l.b16 %v88
    %v230 = vunpack.c.l.b16 %v89
    %v231 = vunpack.c.h.b16 %v89
    %v232 = vunpack.c.l.b16 %v90
    %v233 = vunpack.c.l.b16 %v91
    %v234 = vunpack.c.h.b16 %v91
    %v235 = vunpack.c.l.b16 %v92
    %v236 = vunpack.c.l.b16 %v93
    %v237 = vunpack.c.h.b16 %v93
    %v238 = vunpack.c.l.b16 %v94
    %v239 = vunpack.c.l.b16 %v95
    %v240 = vunpack.c.h.b16 %v95
    %v241 = vunpack.c.l.b16 %v96
    %v242 = vunpack.c.l.b16 %v97
    %v243 = vunpack.c.h.b16 %v97
    %v244 = vunpack.c.l.b16 %v98
    %v245 = vpack.c.b16 %v176, %v173
    %v246 = vpack.c.b16 %v177, %v174
    %v247 = vpack.c.b16 %v178, %v175
    %v248 = vpack.c.b16 %v182, %v179
    %v249 = vpack.c.b16 %v183, %v180
    %v250 = vpack.c.b16 %v184, %v181
    %v251 = vpack.c.b16 %v188, %v185
    %v252 = vpack.c.b16 %v189, %v186
    %v253 = vpack.c.b16 %v190, %v187
    %v254 = vpack.c.b16 %v194, %v191
    %v255 = vpack.c.b16 %v195, %v192
    %v256 = vpack.c.b16 %v196, %v193
    %v257 = vpack.c.b16 %v200, %v197
    %v258 = vpack.c.b16 %v201, %v198
    %v259 = vpack.c.b16 %v202, %v199
    %v260 = vpack.c.b16 %v206, %v203
    %v261 = vpack.c.b16 %v207, %v204
    %v262 = vpack.c.b16 %v208, %v205
    %v263 = vpack.c.b16 %v212, %v209
    %v264 = vpack.c.b16 %v213, %v210
    %v265 = vpack.c.b16 %v214, %v211
    %v266 = vpack.c.b16 %v218, %v215
    %v267 = vpack.c.b16 %v219, %v216
    %v268 = vpack.c.b16 %v220, %v217
    %v269 = vpack.c.b16 %v224, %v221
    %v270 = vpack.c.b16 %v225, %v222
    %v271 = vpack.c.b16 %v226, %v223
    %v272 = vpack.c.b16 %v230, %v227
    %v273 = vpack.c.b16 %v231, %v228
    %v274 = vpack.c.b16 %v232, %v229
    %v275 = vpack.c.b16 %v236, %v233
    %v276 = vpack.c.b16 %v237, %v234
    %v277 = vpack.c.b16 %v238, %v235
    %v278 = vpack.c.b16 %v242, %v239
    %v279 = vpack.c.b16 %v243, %v240
    %v280 = vpack.c.b16 %v244, %v241
    %vm317 = vcmask 523264
    %v319 = vsel %vm317, %v123, 0
    %321 = vmatprep.subr.bf16.mxu0 %v246
    %322 = vmatpush1.bf16.msra.mxu0 %v245
    %323 = vmatprep.subr.bf16.mxu0 %v249
    %324 = vmatpush1.bf16.msra.mxu0 %v248
    %325 = vmatprep.subr.bf16.mxu0 %v252
    %326 = vmatpush1.bf16.msra.mxu0 %v251
    %327 = vmatprep.subr.bf16.mxu0 %v255
    %328 = vmatpush1.bf16.msra.mxu0 %v254
    %329 = vmatprep.subr.bf16.mxu0 %v258
    %330 = vmatpush1.bf16.msra.mxu0 %v257
    %331 = vmatprep.subr.bf16.mxu0 %v261
    %332 = vmatpush1.bf16.msra.mxu0 %v260
    %333 = vmatprep.subr.bf16.mxu0 %v264
    %334 = vmatpush1.bf16.msra.mxu0 %v263
    %335 = vmatprep.subr.bf16.mxu0 %v267
    %336 = vmatpush1.bf16.msra.mxu0 %v266
    %337 = vmatprep.subr.bf16.mxu0 %v270
    %338 = vmatpush1.bf16.msra.mxu0 %v269
    %339 = vmatprep.subr.bf16.mxu0 %v273
    %340 = vmatpush1.bf16.msra.mxu0 %v272
    %341 = vmatprep.subr.bf16.mxu0 %v276
    %342 = vmatpush1.bf16.msra.mxu0 %v275
    %343 = vmatprep.subr.bf16.mxu0 %v279
    %344 = vmatpush1.bf16.msra.mxu0 %v278
    %345 = vmatprep.subr.bf16.mxu0 0
    %346 = vmatpush1.bf16.msra.mxu0 0
    %347 = vmatprep.subr.bf16.mxu0 0
    %348 = vmatpush1.bf16.msra.mxu0 0
    %349 = vmatprep.subr.bf16.mxu0 0
    %350 = vmatpush1.bf16.msra.mxu0 0
    %351 = vmatprep.subr.bf16.mxu0 0
    %352 = vmatpush1.bf16.msra.mxu0 0
    %353 = vmatprep.mubr.bf16.mxu0 %v319
    %354 = vmatmul.mubr.bf16.gmra.mrb[0].mxu0 %v122
    %v355 = vpop.f32.mrb[0].mxu0
    %v356 = vadd.f32 %v104, %v355
    %v357 = vpop.f32.mrb[0].mxu0
    %v358 = vadd.f32 %v108, %v357
    %v359 = vpop.f32.mrb[0].mxu0
    %v360 = vadd.f32 %v104, %v359
    %v361 = vpop.f32.mrb[0].mxu0
    %v362 = vadd.f32 %v108, %v361
    %363 = vdwg.mxu0
    %364 = vmatprep.subr.bf16.mxu0 0
    %365 = vmatpush1.bf16.msra.mxu0 %v247
    %366 = vmatprep.subr.bf16.mxu0 0
    %367 = vmatpush1.bf16.msra.mxu0 %v250
    %368 = vmatprep.subr.bf16.mxu0 0
    %369 = vmatpush1.bf16.msra.mxu0 %v253
    %370 = vmatprep.subr.bf16.mxu0 0
    %371 = vmatpush1.bf16.msra.mxu0 %v256
    %372 = vmatprep.subr.bf16.mxu0 0
    %373 = vmatpush1.bf16.msra.mxu0 %v259
    %374 = vmatprep.subr.bf16.mxu0 0
    %375 = vmatpush1.bf16.msra.mxu0 %v262
    %376 = vmatprep.subr.bf16.mxu0 0
    %377 = vmatpush1.bf16.msra.mxu0 %v265
    %378 = vmatprep.subr.bf16.mxu0 0
    %379 = vmatpush1.bf16.msra.mxu0 %v268
    %380 = vmatprep.subr.bf16.mxu0 0
    %381 = vmatpush1.bf16.msra.mxu0 %v271
    %382 = vmatprep.subr.bf16.mxu0 0
    %383 = vmatpush1.bf16.msra.mxu0 %v274
    %384 = vmatprep.subr.bf16.mxu0 0
    %385 = vmatpush1.bf16.msra.mxu0 %v277
    %386 = vmatprep.subr.bf16.mxu0 0
    %387 = vmatpush1.bf16.msra.mxu0 %v280
    %388 = vmatprep.subr.bf16.mxu0 0
    %389 = vmatpush1.bf16.msra.mxu0 0
    %390 = vmatprep.subr.bf16.mxu0 0
    %391 = vmatpush1.bf16.msra.mxu0 0
    %392 = vmatprep.subr.bf16.mxu0 0
    %393 = vmatpush1.bf16.msra.mxu0 0
    %394 = vmatprep.subr.bf16.mxu0 0
    %395 = vmatpush1.bf16.msra.mxu0 0
    %396 = vmatprep.mubr.bf16.mxu0 %v319
    %397 = vmatmul.mubr.bf16.gmra.mrb[0].mxu0 %v122
    %v398 = vpop.f32.mrb[0].mxu0
    %v399 = vadd.f32 %v112, %v398
    %v400 = vpop.f32.mrb[0].mxu0
    %v401 = vpop.f32.mrb[0].mxu0
    %v402 = vadd.f32 %v112, %v401
    %v403 = vpop.f32.mrb[0].mxu0
    %404 = vdwg.mxu0
    %vm405 = vcmp.ge.f32.partialorder %v356, 0.0
    %vm406 = vcmp.ge.f32.partialorder %v358, 0.0
    %vm407 = vcmp.ge.f32.partialorder %v399, 0.0
    %vm408 = vcmp.ge.f32.partialorder %v360, 0.0
    %vm409 = vcmp.ge.f32.partialorder %v362, 0.0
    %vm410 = vcmp.ge.f32.partialorder %v402, 0.0
    %v411 = vld [vmem:[%s3] sm:$0x7]
    %v413 = vlaneseq
    %v414 = vshrl.u32 %v413, 7
    %v415 = vsub.s32 0, %v414
    %v416 = vrot.slane %v411, %v415
    %v417 = vlaneseq
    %v418 = vshrl.u32 %v417, 7
    %v419 = vsub.s32 1, %v418
    %v420 = vrot.slane %v411, %v419
    %v421 = vlaneseq
    %v422 = vshrl.u32 %v421, 7
    %v423 = vsub.s32 2, %v422
    %v424 = vrot.slane %v411, %v423
    %v428 = vmul.f32 %v416, %v356
    %v429 = vmul.f32 %v420, %v358
    %v430 = vmul.f32 %v424, %v399
    %v431 = vmul.f32 %v416, %v360
    %v432 = vmul.f32 %v420, %v362
    %v433 = vmul.f32 %v424, %v402
    %v434 = vsel %vm405, %v356, %v428
    %v435 = vsel %vm406, %v358, %v429
    %v436 = vsel %vm407, %v399, %v430
    %v437 = vsel %vm408, %v360, %v431
    %v438 = vsel %vm409, %v362, %v432
    %v439 = vsel %vm410, %v402, %v433
    %v440 = vpack.c.bf16 %v437, %v434
    %v441 = vpack.c.bf16 %v438, %v435
    %v442 = vpack.c.bf16 %v439, %v436
    %v443 = vld [vmem:[#allocation3] sm:$0xf]
    %v444 = vld [vmem:[#allocation3 + $0x4] sm:$0xf]
    %v445 = vld [vmem:[#allocation3 + $0x8] sm:$0xf]
    %v446 = vld [vmem:[#allocation3 + $0xc] sm:$0xf]
    %v447 = vld [vmem:[#allocation3 + $0x10] sm:$0xf]
    %v448 = vld [vmem:[#allocation3 + $0x14] sm:$0xf]
    %v449 = vld [vmem:[#allocation3 + $0x18] sm:$0xf]
    %v450 = vld [vmem:[#allocation3 + $0x1c] sm:$0xf]
    %v451 = vld [vmem:[#allocation3 + $0x20] sm:$0xf]
    %v452 = vld [vmem:[#allocation3 + $0x24] sm:$0xf]
    %v453 = vld [vmem:[#allocation3 + $0x28] sm:$0xf]
    %v454 = vld [vmem:[#allocation3 + $0x2c] sm:$0xf]
    %v455 = vld [vmem:[#allocation3 + $0x30] sm:$0xf]
    %v456 = vld [vmem:[#allocation3 + $0x34] sm:$0xf]
    %v457 = vld [vmem:[#allocation3 + $0x38] sm:$0xf]
    %v458 = vld [vmem:[#allocation3 + $0x3c] sm:$0xf]
    %v459 = vld [vmem:[#allocation3 + $0x40] sm:$0xf]
    %v460 = vld [vmem:[#allocation3 + $0x44] sm:$0xf]
    %v461 = vld [vmem:[#allocation3 + $0x48] sm:$0xf]
    %v462 = vld [vmem:[#allocation3 + $0x4c] sm:$0xf]
    %v463 = vld [vmem:[#allocation3 + $0x50] sm:$0xf]
    %v464 = vld [vmem:[#allocation3 + $0x54] sm:$0xf]
    %v465 = vld [vmem:[#allocation3 + $0x58] sm:$0xf]
    %v466 = vld [vmem:[#allocation3 + $0x5c] sm:$0xf]
    %v467 = vld [vmem:[#allocation3 + $0x60] sm:$0xf]
    %v468 = vld [vmem:[#allocation3 + $0x64] sm:$0xf]
    %v469 = vld [vmem:[#allocation3 + $0x68] sm:$0xf]
    %v470 = vld [vmem:[#allocation3 + $0x6c] sm:$0xf]
    %v471 = vld [vmem:[#allocation3 + $0x70] sm:$0xf]
    %v472 = vld [vmem:[#allocation3 + $0x74] sm:$0xf]
    %v473 = vld [vmem:[#allocation3 + $0x78] sm:$0xf]
    %v474 = vld [vmem:[#allocation3 + $0x7c] sm:$0xf]
    %v475 = vld [vmem:[#allocation3 + $0x80] sm:$0xf]
    %v476 = vld [vmem:[#allocation3 + $0x84] sm:$0xf]
    %v477 = vld [vmem:[#allocation3 + $0x88] sm:$0xf]
    %v478 = vld [vmem:[#allocation3 + $0x8c] sm:$0xf]
    %v479 = vld [vmem:[#allocation3 + $0x90] sm:$0xf]
    %v480 = vld [vmem:[#allocation3 + $0x94] sm:$0xf]
    %v481 = vld [vmem:[#allocation3 + $0x98] sm:$0xf]
    %v482 = vld [vmem:[#allocation3 + $0x9c] sm:$0xf]
    %v483 = vld [vmem:[#allocation3 + $0xa0] sm:$0xf]
    %v484 = vld [vmem:[#allocation3 + $0xa4] sm:$0xf]
    %v485 = vld [vmem:[#allocation3 + $0xa8] sm:$0xf]
    %v486 = vld [vmem:[#allocation3 + $0xac] sm:$0xf]
    %v487 = vld [vmem:[#allocation3 + $0xb0] sm:$0xf]
    %v488 = vld [vmem:[#allocation3 + $0xb4] sm:$0xf]
    %v489 = vld [vmem:[#allocation3 + $0xb8] sm:$0xf]
    %v490 = vld [vmem:[#allocation3 + $0xbc] sm:$0xf]
    %v491 = vld [vmem:[%s5] sm:$0x1]
    %v493 = vlaneseq
    %v494 = vshrl.u32 %v493, 7
    %v495 = vsub.s32 0, %v494
    %v496 = vrot.slane %v491, %v495
    %v546 = vunpack.c.l.b16 %v443
    %v547 = vunpack.c.l.b16 %v444
    %v548 = vunpack.c.l.b16 %v445
    %v549 = vunpack.c.l.b16 %v446
    %v550 = vunpack.c.l.b16 %v447
    %v551 = vunpack.c.l.b16 %v448
    %v552 = vunpack.c.l.b16 %v449
    %v553 = vunpack.c.l.b16 %v450
    %v554 = vunpack.c.l.b16 %v451
    %v555 = vunpack.c.l.b16 %v452
    %v556 = vunpack.c.l.b16 %v453
    %v557 = vunpack.c.l.b16 %v454
    %v558 = vunpack.c.l.b16 %v455
    %v559 = vunpack.c.l.b16 %v456
    %v560 = vunpack.c.l.b16 %v457
    %v561 = vunpack.c.l.b16 %v458
    %v562 = vunpack.c.l.b16 %v459
    %v563 = vunpack.c.l.b16 %v460
    %v564 = vunpack.c.l.b16 %v461
    %v565 = vunpack.c.l.b16 %v462
    %v566 = vunpack.c.l.b16 %v463
    %v567 = vunpack.c.l.b16 %v464
    %v568 = vunpack.c.l.b16 %v465
    %v569 = vunpack.c.l.b16 %v466
    %v570 = vunpack.c.l.b16 %v467
    %v571 = vunpack.c.l.b16 %v468
    %v572 = vunpack.c.l.b16 %v469
    %v573 = vunpack.c.l.b16 %v470
    %v574 = vunpack.c.l.b16 %v471
    %v575 = vunpack.c.l.b16 %v472
    %v576 = vunpack.c.l.b16 %v473
    %v577 = vunpack.c.l.b16 %v474
    %v578 = vunpack.c.l.b16 %v475
    %v579 = vunpack.c.l.b16 %v476
    %v580 = vunpack.c.l.b16 %v477
    %v581 = vunpack.c.l.b16 %v478
    %v582 = vunpack.c.l.b16 %v479
    %v583 = vunpack.c.l.b16 %v480
    %v584 = vunpack.c.l.b16 %v481
    %v585 = vunpack.c.l.b16 %v482
    %v586 = vunpack.c.l.b16 %v483
    %v587 = vunpack.c.l.b16 %v484
    %v588 = vunpack.c.l.b16 %v485
    %v589 = vunpack.c.l.b16 %v486
    %v590 = vunpack.c.l.b16 %v487
    %v591 = vunpack.c.l.b16 %v488
    %v592 = vunpack.c.l.b16 %v489
    %v593 = vunpack.c.l.b16 %v490
    %v594 = vpack.c.b16 %v547, %v546
    %v595 = vpack.c.b16 %v549, %v548
    %v596 = vpack.c.b16 %v551, %v550
    %v597 = vpack.c.b16 %v553, %v552
    %v598 = vpack.c.b16 %v555, %v554
    %v599 = vpack.c.b16 %v557, %v556
    %v600 = vpack.c.b16 %v559, %v558
    %v601 = vpack.c.b16 %v561, %v560
    %v602 = vpack.c.b16 %v563, %v562
    %v603 = vpack.c.b16 %v565, %v564
    %v604 = vpack.c.b16 %v567, %v566
    %v605 = vpack.c.b16 %v569, %v568
    %v606 = vpack.c.b16 %v571, %v570
    %v607 = vpack.c.b16 %v573, %v572
    %v608 = vpack.c.b16 %v575, %v574
    %v609 = vpack.c.b16 %v577, %v576
    %v610 = vpack.c.b16 %v579, %v578
    %v611 = vpack.c.b16 %v581, %v580
    %v612 = vpack.c.b16 %v583, %v582
    %v613 = vpack.c.b16 %v585, %v584
    %v614 = vpack.c.b16 %v587, %v586
    %v615 = vpack.c.b16 %v589, %v588
    %v616 = vpack.c.b16 %v591, %v590
    %v617 = vpack.c.b16 %v593, %v592
    %642 = vmatprep.subr.bf16.mxu0 0
    %643 = vmatpush1.bf16.msra.mxu0 %v594
    %644 = vmatprep.subr.bf16.mxu0 0
    %645 = vmatpush1.bf16.msra.mxu0 %v595
    %646 = vmatprep.subr.bf16.mxu0 0
    %647 = vmatpush1.bf16.msra.mxu0 %v596
    %648 = vmatprep.subr.bf16.mxu0 0
    %649 = vmatpush1.bf16.msra.mxu0 %v597
    %650 = vmatprep.subr.bf16.mxu0 0
    %651 = vmatpush1.bf16.msra.mxu0 %v598
    %652 = vmatprep.subr.bf16.mxu0 0
    %653 = vmatpush1.bf16.msra.mxu0 %v599
    %654 = vmatprep.subr.bf16.mxu0 0
    %655 = vmatpush1.bf16.msra.mxu0 %v600
    %656 = vmatprep.subr.bf16.mxu0 0
    %657 = vmatpush1.bf16.msra.mxu0 %v601
    %658 = vmatprep.subr.bf16.mxu0 0
    %659 = vmatpush1.bf16.msra.mxu0 %v602
    %660 = vmatprep.subr.bf16.mxu0 0
    %661 = vmatpush1.bf16.msra.mxu0 %v603
    %662 = vmatprep.subr.bf16.mxu0 0
    %663 = vmatpush1.bf16.msra.mxu0 %v604
    %664 = vmatprep.subr.bf16.mxu0 0
    %665 = vmatpush1.bf16.msra.mxu0 %v605
    %666 = vmatprep.subr.bf16.mxu0 0
    %667 = vmatpush1.bf16.msra.mxu0 %v606
    %668 = vmatprep.subr.bf16.mxu0 0
    %669 = vmatpush1.bf16.msra.mxu0 %v607
    %670 = vmatprep.subr.bf16.mxu0 0
    %671 = vmatpush1.bf16.msra.mxu0 %v608
    %672 = vmatprep.subr.bf16.mxu0 0
    %673 = vmatpush1.bf16.msra.mxu0 %v609
    %674 = vmatprep.mubr.bf16.mxu0 %v441
    %675 = vmatmul.mubr.bf16.gmra.mrb[0].mxu0 %v440
    %v676 = vpop.f32.mrb[0].mxu0
    %v677 = vadd.f32 %v496, %v676
    %v678 = vpop.f32.mrb[0].mxu0
    %v679 = vpop.f32.mrb[0].mxu0
    %v680 = vadd.f32 %v496, %v679
    %v681 = vpop.f32.mrb[0].mxu0
    %682 = vdwg.mxu0
    %683 = vmatprep.subr.bf16.mxu0 0
    %684 = vmatpush1.bf16.msra.mxu0 %v610
    %685 = vmatprep.subr.bf16.mxu0 0
    %686 = vmatpush1.bf16.msra.mxu0 %v611
    %687 = vmatprep.subr.bf16.mxu0 0
    %688 = vmatpush1.bf16.msra.mxu0 %v612
    %689 = vmatprep.subr.bf16.mxu0 0
    %690 = vmatpush1.bf16.msra.mxu0 %v613
    %691 = vmatprep.subr.bf16.mxu0 0
    %692 = vmatpush1.bf16.msra.mxu0 %v614
    %693 = vmatprep.subr.bf16.mxu0 0
    %694 = vmatpush1.bf16.msra.mxu0 %v615
    %695 = vmatprep.subr.bf16.mxu0 0
    %696 = vmatpush1.bf16.msra.mxu0 %v616
    %697 = vmatprep.subr.bf16.mxu0 0
    %698 = vmatpush1.bf16.msra.mxu0 %v617
    %699 = vmatprep.subr.bf16.mxu0 0
    %700 = vmatpush1.bf16.msra.mxu0 0
    %701 = vmatprep.subr.bf16.mxu0 0
    %702 = vmatpush1.bf16.msra.mxu0 0
    %703 = vmatprep.subr.bf16.mxu0 0
    %704 = vmatpush1.bf16.msra.mxu0 0
    %705 = vmatprep.subr.bf16.mxu0 0
    %706 = vmatpush1.bf16.msra.mxu0 0
    %707 = vmatprep.subr.bf16.mxu0 0
    %708 = vmatpush1.bf16.msra.mxu0 0
    %709 = vmatprep.subr.bf16.mxu0 0
    %710 = vmatpush1.bf16.msra.mxu0 0
    %711 = vmatprep.subr.bf16.mxu0 0
    %712 = vmatpush1.bf16.msra.mxu0 0
    %713 = vmatprep.subr.bf16.mxu0 0
    %714 = vmatpush1.bf16.msra.mxu0 0
    %715 = vmatprep.mubr.bf16.mxu0 0
    %716 = vmatmul.mubr.bf16.gmra.mrb[0].mxu0 %v442
    %v717 = vpop.f32.mrb[0].mxu0
    %v718 = vadd.f32 %v677, %v717
    %v719 = vpop.f32.mrb[0].mxu0
    %v720 = vpop.f32.mrb[0].mxu0
    %v721 = vadd.f32 %v680, %v720
    %v722 = vpop.f32.mrb[0].mxu0
    %723 = vdwg.mxu0
    %vm724 = vcmp.ge.f32.partialorder %v718, 0.0
    %vm725 = vcmp.ge.f32.partialorder %v721, 0.0
    %v726 = vld [vmem:[%s6] sm:$0x1]
    %v728 = vlaneseq
    %v729 = vshrl.u32 %v728, 7
    %v730 = vsub.s32 0, %v729
    %v731 = vrot.slane %v726, %v730
    %v733 = vmul.f32 %v731, %v718
    %v734 = vmul.f32 %v731, %v721
    %v735 = vsel %vm724, %v718, %v733
    %v736 = vsel %vm725, %v721, %v734
    %v737 = vld [vmem:[%s7] sm:$0x1]
    %v739 = vlaneseq
    %v740 = vshrl.u32 %v739, 7
    %v741 = vsub.s32 0, %v740
    %v742 = vrot.slane %v737, %v741
    %v744 = vmul.f32 %v735, %v742
    %v745 = vmul.f32 %v736, %v742
    %746 = vadd.xlane.f32.xlu0 %v744
    %v747 = vpop.xlane.xlu0 %746
    %748 = vadd.xlane.f32.xlu0 %v745
    %v749 = vpop.xlane.xlu0 %748
    %v750 = vld [vmem:[#allocation2] sm:$0x1]
    %v752 = vlaneseq
    %v753 = vshrl.u32 %v752, 7
    %v754 = vsub.s32 0, %v753
    %v755 = vrot.slane %v750, %v754
    %v757 = vadd.f32 %v747, %v755
    %v758 = vadd.f32 %v749, %v755
    %vm759 = vcmask 7168
    %760 = vst.msk [vmem:[%s9] sm:$0xff] %vm759, %v757
    %761 = vst.msk [vmem:[%s9 + $0x8] sm:$0xff] %vm759, %v758
    // Predicated region
    $region42: #{cnn6_forward.1} parent=1 // pred_check
      _
    $region43: #{cnn6_forward.1} parent=1 // pred_check_branch
      %763 = sbr.rel (0) target = $region45
    $region44: #{cnn6_forward.1} parent=1 // pred_region
      _
    $region45: #{cnn6_forward.1} parent=1 // pred_fallthru
      _
    // Predicated region
    $region46: #{cnn6_forward.1} parent=1 // pred_check
      _
    $region47: #{cnn6_forward.1} parent=1 // pred_check_branch
      %765 = sbr.rel (0) target = $region49
    $region48: #{cnn6_forward.1} parent=1 // pred_region
      _
    $region49: #{cnn6_forward.1} parent=1 // pred_fallthru
      _
    %766 = vsyncpa [#allocation4], 1

</llo_original>
